<compile_context>
chip_gen: v5e
topology: v5e:2x2
jax: 0.10.0
libtpu: 0.0.40
codegen_flags: <defaults>
</compile_context>

<pallas_src>
import jax
import jax.numpy as jnp
from jax.experimental import pallas as pl
from jax.experimental.pallas import tpu as pltpu


_NEG_LARGE = -1e30  # bias value for padded vocab columns: exp underflows to 0


def _round_up(x, m):
    return ((x + m - 1) // m) * m


def _tpu_defaults():
    """Per-generation tile / VMEM-limit defaults."""
    kind = ""
    try:
        kind = (getattr(jax.devices()[0], "device_kind", "") or "").lower()
    except Exception:
        pass
    if "v7" in kind:                       # 64 MiB VMEM per TensorCore
        return {"tm": 512, "tv": 1024, "vmem_limit": 48 * 1024 * 1024}
    if "v6" in kind:                       # 128 MiB VMEM
        return {"tm": 512, "tv": 4096, "vmem_limit": 96 * 1024 * 1024}
    if "v5p" in kind or "v5" in kind:      # 128 MiB VMEM
        return {"tm": 512, "tv": 4096, "vmem_limit": 96 * 1024 * 1024}
    if "v4" in kind:
        return {"tm": 512, "tv": 2048, "vmem_limit": 64 * 1024 * 1024}
    if "v3" in kind or "v2" in kind:       # small VMEM parts
        return {"tm": 256, "tv": 512, "vmem_limit": 12 * 1024 * 1024}
    # Unknown: conservative (these exact settings compiled cleanly before).
    return {"tm": 256, "tv": 2048, "vmem_limit": 48 * 1024 * 1024}


# ---------------------------------------------------------------------------
# Kernel 1: whole (padded) vocab resident in VMEM -> single pass.
#   x_ref: (TM, D)  compute dtype
#   w_ref: (D,  Vp) compute dtype (pre-transposed, cached)
#   b_ref: (1,  Vp) f32 (padded columns hold -1e30)
#   o_ref: (TM, Vp) out dtype
# ---------------------------------------------------------------------------
def _nlu_single_pass_kernel(x_ref, w_ref, b_ref, o_ref):
    logits = jnp.dot(x_ref[...], w_ref[...],
                     preferred_element_type=jnp.float32) + b_ref[...]
    m = jnp.max(logits, axis=-1, keepdims=True)
    lse = m + jnp.log(jnp.sum(jnp.exp(logits - m), axis=-1, keepdims=True))
    o_ref[...] = (logits - lse).astype(o_ref.dtype)


# ---------------------------------------------------------------------------
# Kernel 2a (pass A): online log-sum-exp over vocab tiles.  Only output is the
# tiny (TM, 1) lse block -> no large HBM writeback during the stats pass.
# ---------------------------------------------------------------------------
def _nlu_stats_kernel(x_ref, w_ref, b_ref, lse_ref, m_sc, l_sc):
    j = pl.program_id(1)

    @pl.when(j == 0)
    def _():
        m_sc[...] = jnp.full_like(m_sc, -jnp.inf)
        l_sc[...] = jnp.zeros_like(l_sc)

    logits = jnp.dot(x_ref[...], w_ref[...],
                     preferred_element_type=jnp.float32) + b_ref[...]
    m_prev = m_sc[...]
    m_new = jnp.maximum(m_prev, jnp.max(logits, axis=-1, keepdims=True))
    l_sc[...] = (l_sc[...] * jnp.exp(m_prev - m_new)
                 + jnp.sum(jnp.exp(logits - m_new), axis=-1, keepdims=True))
    m_sc[...] = m_new

    @pl.when(j == pl.num_programs(1) - 1)
    def _():
        lse_ref[...] = m_sc[...] + jnp.log(l_sc[...])


# ---------------------------------------------------------------------------
# Kernel 2b (pass B): recompute a logits tile, subtract lse, write once.
# ---------------------------------------------------------------------------
def _nlu_write_kernel(x_ref, w_ref, b_ref, lse_ref, o_ref):
    logits = jnp.dot(x_ref[...], w_ref[...],
                     preferred_element_type=jnp.float32) + b_ref[...]
    o_ref[...] = (logits - lse_ref[...]).astype(o_ref.dtype)


class NLUHeadPallas:
    """log_softmax(x @ W.T + b) with cached, preprocessed parameters.

    Weight cast/transpose/padding happens ONCE here (not per forward call).
    """

    def __init__(self, weight, bias, *, tm=None, tv=None,
                 compute_dtype=jnp.bfloat16, out_dtype=jnp.float32,
                 vmem_limit_bytes=None, force_two_pass=False):
        V, D = weight.shape
        assert bias.shape == (V,)
        defaults = _tpu_defaults()
        self.tm = _round_up(int(tm if tm is not None else defaults["tm"]), 8)
        self.tv = _round_up(int(tv if tv is not None else defaults["tv"]), 128)
        self.vmem_limit = int(vmem_limit_bytes if vmem_limit_bytes is not None
                              else defaults["vmem_limit"])
        self.V, self.D = V, D
        self.compute_dtype = compute_dtype
        self.out_dtype = out_dtype

        cbytes = jnp.dtype(compute_dtype).itemsize
        obytes = jnp.dtype(out_dtype).itemsize
        budget = int(self.vmem_limit * 0.85)

        # ---- dispatch: single pass (vocab resident) vs. two-pass tiled ------
        V128 = _round_up(V, 128)                    # minimal lane padding
        single_bytes = (2 * D * V128 * cbytes       # weight (double-buffered)
                        + 2 * V128 * 4              # bias
                        + 2 * self.tm * D * cbytes  # x tile
                        + 2 * self.tm * V128 * obytes)  # output tile
        self.single_pass = (not force_two_pass) and single_bytes <= budget

        if self.single_pass:
            Vp = V128
            tv_eff = Vp
        else:
            tv_eff = min(self.tv, V128)
            while tv_eff > 128:
                tile_bytes = (2 * D * tv_eff * cbytes + 2 * tv_eff * 4
                              + 2 * self.tm * D * cbytes
                              + 2 * self.tm * tv_eff * obytes)
                if tile_bytes <= budget:
                    break
                tv_eff //= 2
            tv_eff = max(tv_eff, 128)
            Vp = _round_up(V, tv_eff)
        self.Vp, self.tv_eff = Vp, tv_eff

        # ---- one-time parameter preprocessing (hoisted out of hot path) -----
        # Pre-transpose to (D, Vp): plain NN contraction in-kernel.
        wt = jnp.asarray(weight).astype(compute_dtype).T          # (D, V)
        b2d = jnp.asarray(bias).astype(jnp.float32).reshape(1, V)
        if Vp != V:
            wt = jnp.pad(wt, ((0, 0), (0, Vp - V)))
            b2d = jnp.pad(b2d, ((0, 0), (0, Vp - V)),
                          constant_values=_NEG_LARGE)
        self.wt = jax.device_put(wt)
        self.b2d = jax.device_put(b2d)

        self._fwd = jax.jit(self._forward_impl)

    # -- public API --------------------------------------------------------
    def __call__(self, encoder_output):
        return self._fwd(encoder_output, self.wt, self.b2d)

    # -- jitted forward ------------------------------------------------------
    def _forward_impl(self, encoder_output, wt, b2d):
        D, V, Vp = self.D, self.V, self.Vp
        lead = encoder_output.shape[:-1]
        assert encoder_output.shape[-1] == D
        M = 1
        for s in lead:
            M *= int(s)

        x2d = encoder_output.reshape(M, D).astype(self.compute_dtype)

        # Row tiling: keep n_row >= 2 when M allows it so the "parallel" row
        # axis can span both TensorCores on v7x.
        Mr = _round_up(M, 8)
        tm_eff = min(self.tm, Mr)
        if tm_eff >= Mr and Mr > 8:
            tm_eff = _round_up((Mr + 1) // 2, 8)
        Mp = _round_up(Mr, tm_eff)
        if Mp != M:
            x2d = jnp.pad(x2d, ((0, Mp - M), (0, 0)))
        n_row = Mp // tm_eff

        if self.single_pass:
            out2d = self._single_pass_call(x2d, wt, b2d, n_row, tm_eff, Mp)
        else:
            out2d = self._two_pass_call(x2d, wt, b2d, n_row, tm_eff, Mp)

        # Skip the unpad slice entirely when shapes already align.
        if Mp != M or Vp != V:
            out2d = out2d[:M, :V]
        return out2d.reshape(*lead, V)

    # -- single-pass path ----------------------------------------------------
    def _single_pass_call(self, x2d, wt, b2d, n_row, tm_eff, Mp):
        D, Vp = self.D, self.Vp
        return pl.pallas_call(
            _nlu_single_pass_kernel,
            out_shape=jax.ShapeDtypeStruct((Mp, Vp), self.out_dtype),
            grid_spec=pltpu.PrefetchScalarGridSpec(
                num_scalar_prefetch=0,
                grid=(n_row,),
                in_specs=[
                    pl.BlockSpec((tm_eff, D), lambda i: (i, 0)),   # x rows
                    pl.BlockSpec((D, Vp), lambda i: (0, 0)),       # weight (resident)
                    pl.BlockSpec((1, Vp), lambda i: (0, 0)),       # bias
                ],
                out_specs=pl.BlockSpec((tm_eff, Vp), lambda i: (i, 0)),
            ),
            compiler_params=pltpu.CompilerParams(
                dimension_semantics=("parallel",),
                vmem_limit_bytes=self.vmem_limit),
        )(x2d, wt, b2d)

    # -- two-pass (vocab-tiled) path ------------------------------------------
    def _two_pass_call(self, x2d, wt, b2d, n_row, tm_eff, Mp):
        D, Vp, tv = self.D, self.Vp, self.tv_eff
        n_voc = Vp // tv

        # Pass A: per-row log-sum-exp (only a tiny (Mp, 1) output).
        lse = pl.pallas_call(
            _nlu_stats_kernel,
            out_shape=jax.ShapeDtypeStruct((Mp, 1), jnp.float32),
            grid_spec=pltpu.PrefetchScalarGridSpec(
                num_scalar_prefetch=0,
                grid=(n_row, n_voc),
                in_specs=[
                    pl.BlockSpec((tm_eff, D), lambda i, j: (i, 0)),
                    pl.BlockSpec((D, tv), lambda i, j: (0, j)),
                    pl.BlockSpec((1, tv), lambda i, j: (0, j)),
                ],
                out_specs=pl.BlockSpec((tm_eff, 1), lambda i, j: (i, 0)),
                scratch_shapes=[pltpu.VMEM((tm_eff, 1), jnp.float32),  # running max
                                pltpu.VMEM((tm_eff, 1), jnp.float32)], # running sum
            ),
            compiler_params=pltpu.CompilerParams(
                dimension_semantics=("parallel", "arbitrary"),
                vmem_limit_bytes=self.vmem_limit),
        )(x2d, wt, b2d)

        # Pass B: recompute logits, subtract lse, write each tile exactly once.
        return pl.pallas_call(
            _nlu_write_kernel,
            out_shape=jax.ShapeDtypeStruct((Mp, Vp), self.out_dtype),
            grid_spec=pltpu.PrefetchScalarGridSpec(
                num_scalar_prefetch=0,
                grid=(n_row, n_voc),
                in_specs=[
                    pl.BlockSpec((tm_eff, D), lambda i, j: (i, 0)),
                    pl.BlockSpec((D, tv), lambda i, j: (0, j)),
                    pl.BlockSpec((1, tv), lambda i, j: (0, j)),
                    pl.BlockSpec((tm_eff, 1), lambda i, j: (i, 0)),
                ],
                out_specs=pl.BlockSpec((tm_eff, tv), lambda i, j: (i, j)),
            ),
            compiler_params=pltpu.CompilerParams(
                dimension_semantics=("parallel", "parallel"),
                vmem_limit_bytes=self.vmem_limit),
        )(x2d, wt, b2d, lse)


def nlu_head_reference(encoder_output, weight, bias):
    logits = jnp.einsum("...d,vd->...v", encoder_output, weight) + bias
    return jax.nn.log_softmax(logits, axis=-1)


if __name__ == "__main__":
    batch, seq, model_dim, vocab_size = 2, 8, 32, 128

    key = jax.random.PRNGKey(0)
    kx, kw, kb = jax.random.split(key, 3)

    encoder_output = jax.random.normal(kx, (batch, seq, model_dim), jnp.float32)
    bound = 1.0 / (model_dim ** 0.5)
    weight = jax.random.uniform(kw, (vocab_size, model_dim), jnp.float32,
                                minval=-bound, maxval=bound)
    bias = jax.random.uniform(kb, (vocab_size,), jnp.float32,
                              minval=-bound, maxval=bound)

    # 1) Single-pass (whole vocab resident) path.
    head = NLUHeadPallas(weight, bias)
    out = jax.block_until_ready(head(encoder_output))
    ref = nlu_head_reference(encoder_output, weight, bias)
    assert out.shape == (batch, seq, vocab_size)
    assert jnp.allclose(out, ref, atol=5e-2, rtol=5e-2), \
        float(jnp.max(jnp.abs(out - ref)))

    # 2) Two-pass vocab-tiled path (online log-sum-exp), forced for testing.
    V2 = 512
    w2 = jax.random.uniform(kw, (V2, model_dim), jnp.float32,
                            minval=-bound, maxval=bound)
    b2 = jax.random.uniform(kb, (V2,), jnp.float32, minval=-bound, maxval=bound)
    head2 = NLUHeadPallas(w2, b2, tv=128, force_two_pass=True)
    assert not head2.single_pass
    out2 = jax.block_until_ready(head2(encoder_output))
    ref2 = nlu_head_reference(encoder_output, w2, b2)
    assert jnp.allclose(out2, ref2, atol=5e-2, rtol=5e-2), \
        float(jnp.max(jnp.abs(out2 - ref2)))

    # 3) Ragged vocab (padding + -1e30 masked bias) through the two-pass path.
    V3 = 200
    head3 = NLUHeadPallas(w2[:V3], b2[:V3], tv=128, force_two_pass=True)
    out3 = jax.block_until_ready(head3(encoder_output))
    ref3 = nlu_head_reference(encoder_output, w2[:V3], b2[:V3])
    assert jnp.allclose(out3, ref3, atol=5e-2, rtol=5e-2), \
        float(jnp.max(jnp.abs(out3 - ref3)))

    print("KERNEL_OK")
</pallas_src>

<mosaic_0001>
module attributes {stable_mosaic.version = 11 : i64} {
  func.func @_nlu_single_pass_kernel(%arg0: i32, %arg1: memref<8x32xbf16, #tpu.memory_space<vmem>>, %arg2: memref<32x128xbf16, #tpu.memory_space<vmem>>, %arg3: memref<1x128xf32, #tpu.memory_space<vmem>>, %arg4: memref<8x128xf32, #tpu.memory_space<vmem>>) attributes {dimension_semantics = [#tpu.dimension_semantics<parallel>], iteration_bounds = array<i64: 2>, scalar_prefetch = 0 : i64, scratch_operands = 0 : i64, tpu.core_type = #tpu.core_type<tc>, window_params = [{transform_indices = @transform_0, window_bounds = array<i64: 8, 32>}, {pipeline_mode = #tpu.pipeline_mode<synchronous>, transform_indices = @transform_1, window_bounds = array<i64: 32, 128>}, {pipeline_mode = #tpu.pipeline_mode<synchronous>, transform_indices = @transform_2, window_bounds = array<i64: 1, 128>}, {transform_indices = @transform_3, window_bounds = array<i64: 8, 128>}]} {
    %c0 = arith.constant 0 : index
    %c0_0 = arith.constant 0 : index
    %0 = vector.load %arg1[%c0, %c0_0] : memref<8x32xbf16, #tpu.memory_space<vmem>>, vector<8x32xbf16>
    %c0_1 = arith.constant 0 : index
    %c0_2 = arith.constant 0 : index
    %1 = vector.load %arg2[%c0_1, %c0_2] : memref<32x128xbf16, #tpu.memory_space<vmem>>, vector<32x128xbf16>
    %cst = arith.constant dense<0.000000e+00> : vector<8x128xf32>
    %2 = tpu.matmul %0, %1, %cst {dimension_numbers = #tpu.dot_dimension_numbers<[1], [0], [0], [1], [0, 0, 1, 1], [], []>} : vector<8x32xbf16>, vector<32x128xbf16>, vector<8x128xf32> -> vector<8x128xf32>
    %c0_3 = arith.constant 0 : index
    %c0_4 = arith.constant 0 : index
    %3 = vector.load %arg3[%c0_3, %c0_4] : memref<1x128xf32, #tpu.memory_space<vmem>>, vector<1x128xf32>
    %4 = vector.broadcast %3 : vector<1x128xf32> to vector<8x128xf32>
    %5 = arith.addf %2, %4 : vector<8x128xf32>
    %cst_5 = arith.constant dense<0xFF800000> : vector<8xf32>
    %6 = vector.multi_reduction <maximumf>, %5, %cst_5 [1] : vector<8x128xf32> to vector<8xf32>
    %7 = vector.shape_cast %6 : vector<8xf32> to vector<8x1xf32>
    %8 = vector.broadcast %7 : vector<8x1xf32> to vector<8x128xf32>
    %9 = arith.subf %5, %8 : vector<8x128xf32>
    %10 = math.exp %9 : vector<8x128xf32>
    %cst_6 = arith.constant dense<0.000000e+00> : vector<8xf32>
    %11 = vector.multi_reduction <add>, %10, %cst_6 [1] : vector<8x128xf32> to vector<8xf32>
    %12 = vector.shape_cast %11 : vector<8xf32> to vector<8x1xf32>
    %13 = math.log %12 : vector<8x1xf32>
    %14 = arith.addf %7, %13 : vector<8x1xf32>
    %15 = vector.broadcast %14 : vector<8x1xf32> to vector<8x128xf32>
    %16 = arith.subf %5, %15 : vector<8x128xf32>
    %c0_7 = arith.constant 0 : index
    %c0_8 = arith.constant 0 : index
    %17 = vector.load %arg4[%c0_7, %c0_8] : memref<8x128xf32, #tpu.memory_space<vmem>>, vector<8x128xf32>
    tpu.vector_store %arg4[%c0_7, %c0_8], %16 {strides = array<i32>} : memref<8x128xf32, #tpu.memory_space<vmem>>, vector<8x128xf32>,
    return
  }
  func.func @transform_0(%arg0: i32) -> (i32, i32) {
    %c0_i32 = arith.constant 0 : i32
    %c0_i32_0 = arith.constant 0 : i32
    return %arg0, %c0_i32 : i32, i32
  }
  func.func @transform_1(%arg0: i32) -> (i32, i32) {
    %c0_i32 = arith.constant 0 : i32
    %c0_i32_0 = arith.constant 0 : i32
    %c0_i32_1 = arith.constant 0 : i32
    return %c0_i32, %c0_i32_0 : i32, i32
  }
  func.func @transform_2(%arg0: i32) -> (i32, i32) {
    %c0_i32 = arith.constant 0 : i32
    %c0_i32_0 = arith.constant 0 : i32
    %c0_i32_1 = arith.constant 0 : i32
    return %c0_i32, %c0_i32_0 : i32, i32
  }
  func.func @transform_3(%arg0: i32) -> (i32, i32) {
    %c0_i32 = arith.constant 0 : i32
    %c0_i32_0 = arith.constant 0 : i32
    return %arg0, %c0_i32 : i32, i32
  }
}

</mosaic_0001>

<llo_original>
// kernel: _forward_impl.1
$region0: #{_forward_impl.1}
  #allocation0 [shape = 'u32[]', space=smem, size = 0x4, offset = 0x4, fixed_abs, tag = 'smem constant byte address 0x4 - core index']
  #allocation1 [shape = 'u32[72,128]{1,0:T(1,128)}', space=vmem, size = 0x9000, scoped, tag = 'internal scratch']
  %s0 = inlined_call_operand.vmem [shape: bf16[16,32], index: 0, kind: input, shape index: {}]
  %s1 = inlined_call_operand.vmem [shape: bf16[32,128], index: 1, kind: input, shape index: {}]
  %s2 = inlined_call_operand.vmem [shape: f32[1,128], index: 2, kind: input, shape index: {}]
  %s3 = inlined_call_operand.hbm [shape: f32[16,128], index: 3, kind: output, shape index: {}]
  %s4 = sld [smem:[#allocation0]]
  $region45: #{_forward_impl.1} parent=0
    _
  %s6 = ssub.s32 1, %s4
  %s7 = scalar_select 0, %s6, %s4
  $region1: #{_forward_impl.1} parent=0
    #allocation2 [shape = 'u8[8192]{0}', space=vmem, size = 0x2000, scoped, tag = 'output window, operand 0']
    #allocation3 [shape = 's32[2]{0}', space=sflag, size = 0x8, scoped, tag = 'scoped memory for _forward_impl.1']
    %8 = vsyncpa [#allocation3], 0
    %s9 = scalar_lea.sflag [#allocation3], 1
    %10 = vsyncpa %s9, 0
    loop: start=0, step=1, limit=4
    $region2: #{_forward_impl.1} parent=1 // loop_pre_header
      _
    $region3: #{_forward_impl.1} parent=1 // loop_header
      %s12 = sphi 0, %s16
      %p13 = scmp.ge.s32.totalorder %s12, 4
      %s22 = sphi 0, %s24
      %s25 = sphi 0, %s22
      %s26 = sphi 0, %s25
      %s42 = sphi 0, %s26
      %s46 = sphi 0, %s46
      %s48 = sphi 0, %s46
      %s49 = sphi 0, %s48
      %s63 = sphi 0, %s49
      %s67 = sphi 0, %s67
      %s69 = sphi 0, %s67
      %s70 = sphi 0, %s69
      %s84 = sphi 0, %s70
      %s90 = sphi 0, %s92
      %s93 = sphi 0, %s90
      %s94 = sphi 0, %s93
      %s110 = sphi 0, %s94
    $region4: #{_forward_impl.1} parent=1 // loop_header_branch
      %15 = sbr.rel (%p13) target = $region8
    $region5: #{_forward_impl.1} parent=1 // loop_body
      %s17 = ssub.s32 %s12, 1
      %s18 = ssub.s32 %s12, 2
      %s19 = sadd.s32 %s12, 1
      %s20 = ssub.s32 %s12, %s19
      %p21 = scmp.eq.s32.totalorder %s20, 0
      %s23 = sadd.s32 %s22, 1
      %s24 = scalar_select %p21, %s22, %s23
      %p27 = pneg %p21
      %p28 = scmp.eq.s32.totalorder %s12, 1
      %p29 = por %p27, %p28
      %p30 = scmp.ne.s32.totalorder %s22, %s25
      %p31 = scmp.eq.s32.totalorder %s12, 0
      %p32 = por %p30, %p31
      %p33 = scmp.ne.s32.totalorder %s22, %s25
      %p34 = scmp.eq.s32.totalorder %s17, 1
      %p35 = por %p33, %p34
      %p36 = scmp.ne.s32.totalorder %s25, %s26
      %p37 = scmp.eq.s32.totalorder %s17, 0
      %p38 = por %p36, %p37
      %p39 = scmp.ne.s32.totalorder %s25, %s26
      %p40 = scmp.eq.s32.totalorder %s18, 1
      %p41 = por %p39, %p40
      %p43 = scmp.ne.s32.totalorder %s26, %s42
      %p44 = scmp.eq.s32.totalorder %s18, 0
      %p45 = por %p43, %p44
      %s47 = sadd.s32 %s46, 1
      %p50 = scmp.eq.s32.totalorder %s12, 1
      %p51 = scmp.ne.s32.totalorder %s46, %s48
      %p52 = scmp.eq.s32.totalorder %s12, 0
      %p53 = por %p51, %p52
      %p54 = scmp.ne.s32.totalorder %s46, %s48
      %p55 = scmp.eq.s32.totalorder %s17, 1
      %p56 = por %p54, %p55
      %p57 = scmp.ne.s32.totalorder %s48, %s49
      %p58 = scmp.eq.s32.totalorder %s17, 0
      %p59 = por %p57, %p58
      %p60 = scmp.ne.s32.totalorder %s48, %s49
      %p61 = scmp.eq.s32.totalorder %s18, 1
      %p62 = por %p60, %p61
      %p64 = scmp.ne.s32.totalorder %s49, %s63
      %p65 = scmp.eq.s32.totalorder %s18, 0
      %p66 = por %p64, %p65
      %s68 = sadd.s32 %s67, 1
      %p71 = scmp.eq.s32.totalorder %s12, 1
      %p72 = scmp.ne.s32.totalorder %s67, %s69
      %p73 = scmp.eq.s32.totalorder %s12, 0
      %p74 = por %p72, %p73
      %p75 = scmp.ne.s32.totalorder %s67, %s69
      %p76 = scmp.eq.s32.totalorder %s17, 1
      %p77 = por %p75, %p76
      %p78 = scmp.ne.s32.totalorder %s69, %s70
      %p79 = scmp.eq.s32.totalorder %s17, 0
      %p80 = por %p78, %p79
      %p81 = scmp.ne.s32.totalorder %s69, %s70
      %p82 = scmp.eq.s32.totalorder %s18, 1
      %p83 = por %p81, %p82
      %p85 = scmp.ne.s32.totalorder %s70, %s84
      %p86 = scmp.eq.s32.totalorder %s18, 0
      %p87 = por %p85, %p86
      %s88 = ssub.s32 %s12, %s19
      %p89 = scmp.eq.s32.totalorder %s88, 0
      %s91 = sadd.s32 %s90, 1
      %s92 = scalar_select %p89, %s90, %s91
      %p95 = pneg %p89
      %p96 = scmp.eq.s32.totalorder %s12, 1
      %p97 = por %p95, %p96
      %p98 = scmp.ne.s32.totalorder %s90, %s93
      %p99 = scmp.eq.s32.totalorder %s12, 0
      %p100 = por %p98, %p99
      %p101 = scmp.ne.s32.totalorder %s90, %s93
      %p102 = scmp.eq.s32.totalorder %s17, 1
      %p103 = por %p101, %p102
      %p104 = scmp.ne.s32.totalorder %s93, %s94
      %p105 = scmp.eq.s32.totalorder %s17, 0
      %p106 = por %p104, %p105
      %p107 = scmp.ne.s32.totalorder %s93, %s94
      %p108 = scmp.eq.s32.totalorder %s18, 1
      %p109 = por %p107, %p108
      %p111 = scmp.ne.s32.totalorder %s94, %s110
      %p112 = scmp.eq.s32.totalorder %s18, 0
      %p113 = por %p111, %p112
      %p114 = scmp.le.s32.totalorder 1, %s12
      %p115 = scmp.lt.s32.totalorder %s12, 3
      %p116 = pnand %p114, %p115
      %p117 = pneg %p116
      // Predicated region
      $region9: #{_forward_impl.1} parent=5 // pred_check
        _
      $region10: #{_forward_impl.1} parent=5 // pred_check_branch
        %119 = sbr.rel (%p116) target = $region12
      $region11: #{_forward_impl.1} parent=5 // pred_region
        %s120 = ssub.s32 %s12, 1
        // Predicated region
        $region13: #{_forward_impl.1} parent=11 // pred_check
          %p121 = pneg %p59
        $region14: #{_forward_impl.1} parent=11 // pred_check_branch
          %123 = sbr.rel (%p121) target = $region16
        $region15: #{_forward_impl.1} parent=11 // pred_region
          _
        $region16: #{_forward_impl.1} parent=11 // pred_fallthru
          _
        // Predicated region
        $region17: #{_forward_impl.1} parent=11 // pred_check
          %p124 = pneg %p80
        $region18: #{_forward_impl.1} parent=11 // pred_check_branch
          %126 = sbr.rel (%p124) target = $region20
        $region19: #{_forward_impl.1} parent=11 // pred_region
          _
        $region20: #{_forward_impl.1} parent=11 // pred_fallthru
          _
      $region12: #{_forward_impl.1} parent=5 // pred_fallthru
        _
      %p127 = scmp.lt.s32.totalorder %s12, 2
      // Predicated region
      $region21: #{_forward_impl.1} parent=5 // pred_check
        %p128 = pneg %p127
      $region22: #{_forward_impl.1} parent=5 // pred_check_branch
        %130 = sbr.rel (%p128) target = $region24
      $region23: #{_forward_impl.1} parent=5 // pred_region
        // Predicated region
        $region25: #{_forward_impl.1} parent=23 // pred_check
          %p131 = pneg %p32
        $region26: #{_forward_impl.1} parent=23 // pred_check_branch
          %133 = sbr.rel (%p131) target = $region28
        $region27: #{_forward_impl.1} parent=23 // pred_region
          %p134 = scmp.lt.s32.totalorder %s12, 1
          %s135 = scalar_select %p134, %s12, 1
          %s136 = smul.addr %s135, 4
          %s137 = scalar_lea.vmem %s0, %s136
        $region28: #{_forward_impl.1} parent=23 // pred_fallthru
          _
      $region24: #{_forward_impl.1} parent=5 // pred_fallthru
        _
      %p138 = scmp.le.s32.totalorder 1, %s12
      %p139 = scmp.lt.s32.totalorder %s12, 3
      %p140 = pnand %p138, %p139
      %p141 = pneg %p140
      // Predicated region
      $region29: #{_forward_impl.1} parent=5 // pred_check
        _
      $region30: #{_forward_impl.1} parent=5 // pred_check_branch
        %143 = sbr.rel (%p140) target = $region32
      $region31: #{_forward_impl.1} parent=5 // pred_region
        %s144 = ssub.s32 %s12, 1
        %p145 = scmp.lt.s32.totalorder %s17, 1
        %s146 = scalar_select %p145, %s17, 1
        %s147 = smul.addr %s146, 4
        %s148 = scalar_lea.vmem %s0, %s147
        %p149 = pneg %p38
        %p150 = pneg %p35
        %p151 = pneg %p59
        %p152 = pneg %p56
        %p153 = pneg %p80
        %p154 = pneg %p77
        %p155 = pneg %p106
        %p156 = pneg %p103
        %s157 = sand.u32 %s93, 1
        %s158 = scalar_lea.sflag [#allocation3], %s157
        %s159 = sand.u32 %s93, 1
        %s160 = smul.addr %s159, 8
        %s161 = scalar_lea.vmem [#allocation2], %s160
        %p162 = scmp.lt.s32.totalorder %s17, 1
        %s163 = scalar_select %p162, %s17, 1
        %s164 = smul.addr %s163, 4
        %s165 = scalar_lea.vmem %s0, %s164
        %v167 = vld [vmem:[%s165] sm:$0xf]
        %v168 = vld [vmem:[%s1] sm:$0xf]
        %v169 = vld [vmem:[%s1 + $0x4] sm:$0xf]
        %v170 = vld [vmem:[%s1 + $0x8] sm:$0xf]
        %v171 = vld [vmem:[%s1 + $0xc] sm:$0xf]
        %v172 = vld [vmem:[%s2] sm:$0x1]
        %v174 = vperm.slane %v172, 0
        %v180 = vunpack.c.l.b16 %v168
        %v181 = vunpack.c.l.b16 %v169
        %v182 = vunpack.c.l.b16 %v170
        %v183 = vunpack.c.l.b16 %v171
        %v184 = vpack.c.b16 %v181, %v180
        %v185 = vpack.c.b16 %v183, %v182
        %vm188 = vcmask 261120
        %v190 = vsel %vm188, %v167, 0
        %192 = vmatpush.bf16.msra.mxu0 0
        %193 = vmatpush.bf16.msra.mxu0 0
        %194 = vmatpush.bf16.msra.mxu0 0
        %195 = vmatpush.bf16.msra.mxu0 0
        %196 = vmatpush.bf16.msra.mxu0 0
        %197 = vmatpush.bf16.msra.mxu0 0
        %198 = vmatpush.bf16.msra.mxu0 %v185
        %199 = vmatpush.bf16.msra.mxu0 %v184
        %200 = vmatmul.bf16.gmra.mxu0 %v190
        %v201 = vpop.f32.mrf.mxu0
        %v202 = vadd.f32 %v174, %v201
        %v203 = vpop.f32.mrf.mxu0
        %204 = vdwg.mxu0
        %205 = vmax.xlane.f32.xlu0 %v202
        %v206 = vpop.xlane.xlu0 %205
        %v207 = vsub.f32 %v202, %v206
        %v208 = vmul.f32 %v207, 1.442695
        %v209 = vpow.pop %v208
        %210 = vadd.xlane.f32.xlu0 %v209
        %v211 = vpop.xlane.xlu0 %210
        %v212 = vlog2.pop %v211
        %v213 = vmul.f32 %v212, 0.6931472
        %v214 = vadd.f32 %v206, %v213
        %v215 = vsub.f32 %v202, %v214
        %216 = vst [vmem:[%s161] sm:$0xff] %v215
        %s217 = sand.u32 %s93, 1
        %s218 = scalar_lea.sflag [#allocation3], %s217
        %s219 = sand.u32 %s93, 1
        %s220 = smul.addr %s219, 8
        %s221 = scalar_lea.vmem [#allocation2], %s220
        // Predicated region
        $region33: #{_forward_impl.1} parent=31 // pred_check
          %p222 = pneg %p103
        $region34: #{_forward_impl.1} parent=31 // pred_check_branch
          %224 = sbr.rel (%p222) target = $region36
        $region35: #{_forward_impl.1} parent=31 // pred_region
          %226 = vsyncadd %s218, 0
          %s227 = smul.addr %s17, 8
          %s228 = scalar_lea.hbm %s3, %s227
          %s230 = sshll.u32 %s221, 4
          %s231 = int_to_ptr.vmem [resolvable:$true] %s230
          %s232 = sshll.u32 %s228, 4
          %s233 = int_to_ptr.hbm [resolvable:$true] %s232
          %235 = dma.vmem_to_hbm [thread:$0]  %s231, 128, %s233, %s218
        $region36: #{_forward_impl.1} parent=31 // pred_fallthru
          _
      $region32: #{_forward_impl.1} parent=5 // pred_fallthru
        _
      %p236 = scmp.le.s32.totalorder 2, %s12
      // Predicated region
      $region37: #{_forward_impl.1} parent=5 // pred_check
        %p237 = pneg %p236
      $region38: #{_forward_impl.1} parent=5 // pred_check_branch
        %239 = sbr.rel (%p237) target = $region40
      $region39: #{_forward_impl.1} parent=5 // pred_region
        %s240 = ssub.s32 %s12, 2
        // Predicated region
        $region41: #{_forward_impl.1} parent=39 // pred_check
          %p241 = pneg %p109
        $region42: #{_forward_impl.1} parent=39 // pred_check_branch
          %243 = sbr.rel (%p241) target = $region44
        $region43: #{_forward_impl.1} parent=39 // pred_region
          %s244 = sand.u32 %s94, 1
          %s245 = scalar_lea.sflag [#allocation3], %s244
          %s246 = sand.u32 %s94, 1
          %s247 = smul.addr %s246, 8
          %s248 = scalar_lea.vmem [#allocation2], %s247
          %250 = dma.done %s245, 128
        $region44: #{_forward_impl.1} parent=39 // pred_fallthru
          _
      $region40: #{_forward_impl.1} parent=5 // pred_fallthru
        _
    $region6: #{_forward_impl.1} parent=1 // loop_footer
      %s16 = sadd.s32 1, %s12
    $region7: #{_forward_impl.1} parent=1 // loop_footer_branch
      %11 = sbr.rel target = $region3
    $region8: #{_forward_impl.1} parent=1 // loop_exit
      _
    %251 = vsyncpa [#allocation3], 1
    %s252 = scalar_lea.sflag [#allocation3], 1
    %253 = vsyncpa %s252, 1

</llo_original>
